<compile_context>
chip_gen: v5e
topology: v5e:2x2
jax: 0.10.0
libtpu: 0.0.40
codegen_flags: <defaults>
</compile_context>

<pallas_src>
import functools

import jax
import jax.numpy as jnp
from jax import lax
from jax.experimental import pallas as pl
from jax.experimental.pallas import tpu as pltpu


# ----------------------------------------------------------------------------- #
# Config (small synthetic shapes consistent with the FSMN-MT encoder + 2 CTCs)
# ----------------------------------------------------------------------------- #
B, T, D_IN = 2, 16, 32          # batch, frames, input feature dim
INPUT_AFFINE_DIM = 32
LINEAR_DIM = 64
PROJ_DIM = 32
FSMN_LAYERS = 2
LORDER, RORDER = 3, 1
LSTRIDE, RSTRIDE = 1, 1
OUTPUT_AFFINE_DIM = 32
OUT_DIM1 = 48                   # encoder.output_size()
OUT_DIM2 = 40                   # encoder.output_size2()
VOCAB1 = 16                     # vocab_size   (CTC head 1)
VOCAB2 = 12                     # vocab_size2  (CTC head 2)
BLANK_ID = 0
IGNORE_ID = -1

OUT_PAD = 128                   # lane-dense kernel output width (>= VOCAB1+VOCAB2)

# ------------------------- weight "megablock" layout ------------------------- #
# One (MEGA_ROWS, 128) f32 tensor carries every weight/bias/tap -> single DMA.
# All row offsets are multiples of 8 (sublane tile aligned).
ROW_B_IN = 0                                   # b_in          cols [0:LINEAR_DIM)
ROW_AFF_B0 = 1                                 # aff_b[l]      rows 1..FSMN_LAYERS
ROW_B_HEAD = 1 + FSMN_LAYERS                   # b_head        cols [0:128)
TAP_BASE = 8                                   # per-layer 8-row tap block
TAP_ROWS = 8                                   #   row 0: 1 + wl[lorder-1] (center scale)
                                               #   rows 1..lorder-1: wl[0..lorder-2]
                                               #   rows lorder..lorder+rorder-1: wr
W_IN_ROW = TAP_BASE + FSMN_LAYERS * TAP_ROWS   # W_in (D_IN, LINEAR_DIM)
LAYER_W_ROW = W_IN_ROW + D_IN                  # per-layer lin_w (LINEAR,PROJ) + aff_w (PROJ,LINEAR)
LAYER_W_STRIDE = LINEAR_DIM + PROJ_DIM
W_HEAD_ROW = LAYER_W_ROW + FSMN_LAYERS * LAYER_W_STRIDE   # W_head (LINEAR_DIM, 128)
MEGA_ROWS = W_HEAD_ROW + LINEAR_DIM
assert MEGA_ROWS % 8 == 0 and all(r % 8 == 0 for r in (W_IN_ROW, LAYER_W_ROW, W_HEAD_ROW))


# ----------------------------------------------------------------------------- #
# Fused Pallas kernel: full encoder + two heads + two CTC projections + log_softmax
# ----------------------------------------------------------------------------- #
def _fused_kernel(x_ref, w_ref, out_ref, *,
                  n_layers, t_len, lorder, rorder, lstride, rstride, v1, v2):
    f32 = jnp.float32
    x = x_ref[...].astype(f32)                                   # (M, D_IN)
    m_rows = x.shape[0]

    # ---- folded input affine: x @ (in_w1 @ in_w2) + b_in -> ReLU ----------------
    w_in = w_ref[W_IN_ROW:W_IN_ROW + D_IN, :LINEAR_DIM]
    b_in = w_ref[ROW_B_IN:ROW_B_IN + 1, :LINEAR_DIM]
    h = jnp.maximum(jnp.dot(x, w_in, preferred_element_type=f32) + b_in, 0.0)

    # per-row time index (row = b*T + t); block starts are multiples of t_len so the
    # block-local index works.  Used to mask taps that would cross a batch boundary
    # (== zero padding of the depthwise temporal conv), incl. roll wrap-around.
    row_idx = lax.broadcasted_iota(jnp.int32, (m_rows, 1), 0)
    t_idx = row_idx % t_len                                      # (M, 1)

    # ---- FSMN blocks: LinearTransform (no bias) -> memory -> Affine -> ReLU -----
    for l in range(n_layers):
        lin_row = LAYER_W_ROW + l * LAYER_W_STRIDE
        aff_row = lin_row + LINEAR_DIM
        tap_row = TAP_BASE + l * TAP_ROWS

        lin_w = w_ref[lin_row:lin_row + LINEAR_DIM, :PROJ_DIM]   # (LINEAR, PROJ)
        aff_w = w_ref[aff_row:aff_row + PROJ_DIM, :LINEAR_DIM]   # (PROJ, LINEAR)
        aff_b = w_ref[ROW_AFF_B0 + l:ROW_AFF_B0 + l + 1, :LINEAR_DIM]
        taps = w_ref[tap_row:tap_row + TAP_ROWS, :PROJ_DIM]      # hoisted: one load/layer

        proj = jnp.dot(h, lin_w, preferred_element_type=f32)     # (M, PROJ)

        # center tap folded offline: acc = proj * (1 + wl[lorder-1])
        acc = proj * taps[0:1, :]
        # remaining left (causal) taps: out[t] += wl[i] * x[t - (lorder-1-i)*lstride]
        for i in range(lorder - 1):
            d = (lorder - 1 - i) * lstride
            tap = pltpu.roll(proj, shift=d, axis=0)              # row r <- proj[r-d]
            tap = jnp.where(t_idx >= d, tap, 0.0)                # batch-edge zero pad
            acc = acc + taps[1 + i:2 + i, :] * tap
        # right (lookahead) taps: out[t] += wr[j] * x[t + (j+1)*rstride]
        for j in range(rorder):
            a = (j + 1) * rstride
            tap = pltpu.roll(proj, shift=m_rows - a, axis=0)     # row r <- proj[r+a]
            tap = jnp.where(t_idx < (t_len - a), tap, 0.0)
            acc = acc + taps[lorder + j:lorder + j + 1, :] * tap

        h = jnp.maximum(jnp.dot(acc, aff_w, preferred_element_type=f32) + aff_b, 0.0)

    # ---- folded heads: one (LINEAR, 128) matmul = out*a @ out*b @ ctc (blockdiag) --
    w_head = w_ref[W_HEAD_ROW:W_HEAD_ROW + LINEAR_DIM, :]
    b_head = w_ref[ROW_B_HEAD:ROW_B_HEAD + 1, :]
    y = jnp.dot(h, w_head, preferred_element_type=f32) + b_head  # (M, 128) lane-dense

    # ---- two-head masked log_softmax with a SINGLE shared exp pass ---------------
    col = lax.broadcasted_iota(jnp.int32, y.shape, 1)
    neg_inf = jnp.float32(-1e30)
    in_h1 = col < v1
    valid = col < (v1 + v2)
    mx1 = jnp.max(jnp.where(in_h1, y, neg_inf), axis=-1, keepdims=True)
    mx2 = jnp.max(jnp.where(valid & jnp.logical_not(in_h1), y, neg_inf),
                  axis=-1, keepdims=True)
    mx_row = jnp.where(in_h1, mx1, mx2)                          # per-column head max
    ez = jnp.exp(jnp.where(valid, y - mx_row, neg_inf))          # one exp over (M, 128)
    s1 = jnp.sum(jnp.where(in_h1, ez, 0.0), axis=-1, keepdims=True)
    s2 = jnp.sum(jnp.where(in_h1, 0.0, ez), axis=-1, keepdims=True)  # pad cols exp()==0
    lse = jnp.where(in_h1, jnp.log(s1), jnp.log(s2))
    out = jnp.where(valid, (y - mx_row) - lse, 0.0)
    out_ref[...] = out.astype(out_ref.dtype)                     # single unmasked store


# ----------------------------------------------------------------------------- #
# Wrapper: offline folds + weight packing, then one gridded pallas_call
# ----------------------------------------------------------------------------- #
def _build_megablock(p):
    """Fold affine chains offline and pack everything into one (MEGA_ROWS, 128) block."""
    n_layers = len(p["fsmn_layers"])
    mega = jnp.zeros((MEGA_ROWS, OUT_PAD), jnp.float32)

    # --- input affine fold: W_in = in_w1 @ in_w2, b_in = in_b1 @ in_w2 + in_b2 ---
    w_in = p["in_w1"] @ p["in_w2"]
    b_in = p["in_b1"] @ p["in_w2"] + p["in_b2"]
    mega = mega.at[W_IN_ROW:W_IN_ROW + D_IN, :LINEAR_DIM].set(w_in)
    mega = mega.at[ROW_B_IN, :LINEAR_DIM].set(b_in)

    # --- per-layer FSMN weights + taps -------------------------------------------
    for l, lyr in enumerate(p["fsmn_layers"]):
        lin_row = LAYER_W_ROW + l * LAYER_W_STRIDE
        aff_row = lin_row + LINEAR_DIM
        tap_row = TAP_BASE + l * TAP_ROWS
        mega = mega.at[lin_row:lin_row + LINEAR_DIM, :PROJ_DIM].set(lyr["lin_w"])
        mega = mega.at[aff_row:aff_row + PROJ_DIM, :LINEAR_DIM].set(lyr["aff_w"])
        mega = mega.at[ROW_AFF_B0 + l, :LINEAR_DIM].set(lyr["aff_b"])
        # taps: row 0 = center scale (1 + wl[lorder-1]); rows 1..lorder-1 = wl[0..-2];
        #       rows lorder.. = wr
        mega = mega.at[tap_row, :PROJ_DIM].set(1.0 + lyr["mem_wl"][LORDER - 1])
        if LORDER > 1:
            mega = mega.at[tap_row + 1:tap_row + LORDER, :PROJ_DIM].set(
                lyr["mem_wl"][:LORDER - 1])
        mega = mega.at[tap_row + LORDER:tap_row + LORDER + RORDER, :PROJ_DIM].set(
            lyr["mem_wr"])

    # --- head folds: W = out*a_w @ out*b_w @ ctc*_w, b = ((ba@B)+bb)@C + bc -------
    w1 = p["out1a_w"] @ p["out1b_w"] @ p["ctc_w"]                   # (LINEAR, V1)
    b1 = (p["out1a_b"] @ p["out1b_w"] + p["out1b_b"]) @ p["ctc_w"] + p["ctc_b"]
    w2 = p["out2a_w"] @ p["out2b_w"] @ p["ctc2_w"]                  # (LINEAR, V2)
    b2 = (p["out2a_b"] @ p["out2b_w"] + p["out2b_b"]) @ p["ctc2_w"] + p["ctc2_b"]
    mega = mega.at[W_HEAD_ROW:W_HEAD_ROW + LINEAR_DIM, :VOCAB1].set(w1)
    mega = mega.at[W_HEAD_ROW:W_HEAD_ROW + LINEAR_DIM, VOCAB1:VOCAB1 + VOCAB2].set(w2)
    mega = mega.at[ROW_B_HEAD, :VOCAB1].set(b1)
    mega = mega.at[ROW_B_HEAD, VOCAB1:VOCAB1 + VOCAB2].set(b2)
    return mega


def _pick_block_rows(m, t_len, target_rows=512):
    """Largest multiple of t_len that divides m, close to target_rows (v7x VMEM-safe)."""
    nseq = m // t_len
    best = t_len
    for k in range(1, nseq + 1):
        if nseq % k == 0 and k * t_len <= max(target_rows, t_len):
            best = k * t_len
    return best


def fused_encoder_ctc_logprobs(params, speech, block_rows=None):
    """speech: (B, T, D_IN) -> (logp1 (B,T,V1), logp2 (B,T,V2)) in one pallas_call."""
    b, t_len, d_in = speech.shape
    m = b * t_len
    x2 = speech.reshape(m, d_in)
    mega = _build_megablock(params)

    if block_rows is None:
        block_rows = _pick_block_rows(m, t_len)
    assert m % block_rows == 0 and block_rows % t_len == 0
    assert block_rows % 8 == 0 or block_rows == m
    grid = (m // block_rows,)

    out = pl.pallas_call(
        functools.partial(_fused_kernel, n_layers=FSMN_LAYERS, t_len=t_len,
                          lorder=LORDER, rorder=RORDER,
                          lstride=LSTRIDE, rstride=RSTRIDE,
                          v1=VOCAB1, v2=VOCAB2),
        out_shape=jax.ShapeDtypeStruct((m, OUT_PAD), jnp.float32),
        grid=grid,
        in_specs=[
            pl.BlockSpec((block_rows, d_in), lambda i: (i, 0)),      # activations: row-blocked
            pl.BlockSpec((MEGA_ROWS, OUT_PAD), lambda i: (0, 0)),    # weights: VMEM-resident
        ],
        out_specs=pl.BlockSpec((block_rows, OUT_PAD), lambda i: (i, 0)),
        compiler_params=pltpu.CompilerParams(
            dimension_semantics=("parallel",)),                      # 2 TCs on v7x
    )(x2, mega)

    logp1 = out[:, :VOCAB1].reshape(b, t_len, VOCAB1)
    logp2 = out[:, VOCAB1:VOCAB1 + VOCAB2].reshape(b, t_len, VOCAB2)
    return logp1, logp2


# ----------------------------------------------------------------------------- #
# CTC loss (forward / alpha recursion) — plain JAX DP over time
# TODO(synk): the per-timestep CTC alpha recursion is a sequential data-dependent
#             DP; it is implemented with lax.scan in plain JAX, not as a Pallas kernel.
# ----------------------------------------------------------------------------- #
def ctc_neg_log_likelihood(log_probs, input_lengths, labels, label_lengths,
                           blank=BLANK_ID):
    """log_probs: (B, T, V) log-softmax. Returns per-sequence NLL, shape (B,)."""
    bsz, t_len, _ = log_probs.shape
    u_max = labels.shape[1]
    s_len = 2 * u_max + 1
    neg_inf = jnp.float32(-1e30)

    labels = jnp.where(labels >= 0, labels, blank).astype(jnp.int32)
    ext = jnp.full((bsz, s_len), blank, dtype=jnp.int32)
    ext = ext.at[:, 1::2].set(labels)                       # blank-interleaved

    # lp_ext[b, t, s] = log_probs[b, t, ext[b, s]]
    idx = jnp.broadcast_to(ext[:, None, :], (bsz, t_len, s_len))
    lp_ext = jnp.take_along_axis(log_probs, idx, axis=2)

    s_idx = jnp.arange(s_len)[None, :]
    valid_s = s_idx < (2 * label_lengths[:, None] + 1)

    # skip transition allowed for label positions whose label differs from s-2
    skip = jnp.zeros((bsz, s_len), dtype=bool)
    if s_len > 2:
        same = ext[:, 2:] == ext[:, :-2]
        is_label = (jnp.arange(2, s_len)[None, :] % 2) == 1
        skip = skip.at[:, 2:].set(is_label & (~same))

    alpha0 = jnp.full((bsz, s_len), neg_inf)
    alpha0 = alpha0.at[:, 0].set(lp_ext[:, 0, 0])
    alpha0 = alpha0.at[:, 1].set(
        jnp.where(label_lengths > 0, lp_ext[:, 0, 1], neg_inf))
    alpha0 = jnp.where(valid_s, alpha0, neg_inf)

    def step(alpha, t):
        a0 = alpha
        a1 = jnp.concatenate([jnp.full((bsz, 1), neg_inf), a0[:, :-1]], axis=1)
        a2 = jnp.concatenate([jnp.full((bsz, 2), neg_inf), a0[:, :-2]], axis=1)
        a2 = jnp.where(skip, a2, neg_inf)
        comb = jnp.logaddexp(jnp.logaddexp(a0, a1), a2)
        lp_t = jnp.take(lp_ext, t, axis=1)                  # (B, S)
        new_a = comb + lp_t
        new_a = jnp.where(valid_s, new_a, neg_inf)
        active = (t < input_lengths)[:, None]
        new_a = jnp.where(active, new_a, a0)                # freeze past seq end
        return new_a, None

    alpha, _ = lax.scan(step, alpha0, jnp.arange(1, t_len))

    last_blank = 2 * label_lengths                          # (B,)
    a_blank = jnp.take_along_axis(alpha, last_blank[:, None], axis=1)[:, 0]
    a_label = jnp.take_along_axis(
        alpha, jnp.maximum(last_blank - 1, 0)[:, None], axis=1)[:, 0]
    a_label = jnp.where(label_lengths > 0, a_label, neg_inf)
    log_like = jnp.logaddexp(a_blank, a_label)
    return -log_like


def calc_ctc_loss_from_logp(log_probs, encoder_out_lens, ys_pad, ys_lens):
    nll = ctc_neg_log_likelihood(log_probs, encoder_out_lens, ys_pad, ys_lens)
    return jnp.sum(nll) / log_probs.shape[0]


# ----------------------------------------------------------------------------- #
# Full FsmnKWSMT.forward
# ----------------------------------------------------------------------------- #
def fsmn_kws_mt_forward(params, speech, speech_lengths, text, text_lengths,
                        text2, text2_lengths):
    batch_size = speech.shape[0]
    # encode() — specaug (train-only) and normalize are None in this config.
    # The fused Pallas kernel emits the two CTC log-prob tensors directly
    # (ctc_lo + log_softmax fused into the encoder kernel).
    logp1, logp2 = fused_encoder_ctc_logprobs(params, speech)
    encoder_out_lens = speech_lengths

    loss_ctc = calc_ctc_loss_from_logp(logp1, encoder_out_lens, text, text_lengths)
    loss_ctc2 = calc_ctc_loss_from_logp(logp2, encoder_out_lens, text2, text2_lengths)

    loss = 0.5 * loss_ctc + 0.5 * loss_ctc2
    stats = {
        "loss_ctc": loss_ctc,
        "cer_ctc": None,
        "loss_ctc2": loss_ctc2,
        "cer_ctc2": None,
        "cer": None,
        "cer2": None,
        "loss": loss,
    }
    weight = jnp.asarray(batch_size, jnp.float32)
    return loss, stats, weight


# ----------------------------------------------------------------------------- #
# Plain-JAX reference of the encoder + CTC projections (for numerical validation)
# ----------------------------------------------------------------------------- #
def reference_logprobs(params, speech):
    def aff(x, w, b):
        return jnp.einsum("btd,de->bte", x, w) + b

    t_len = speech.shape[1]
    lpad = (LORDER - 1) * LSTRIDE
    rpad = RORDER * RSTRIDE

    h = aff(speech, params["in_w1"], params["in_b1"])
    h = jax.nn.relu(aff(h, params["in_w2"], params["in_b2"]))
    for lyr in params["fsmn_layers"]:
        p = jnp.einsum("btd,de->bte", h, lyr["lin_w"])
        xp = jnp.pad(p, ((0, 0), (lpad, rpad), (0, 0)))
        acc = p
        for i in range(LORDER):
            off = i * LSTRIDE
            acc = acc + lyr["mem_wl"][i][None, None, :] * xp[:, off:off + t_len, :]
        for j in range(RORDER):
            off = lpad + (j + 1) * RSTRIDE
            acc = acc + lyr["mem_wr"][j][None, None, :] * xp[:, off:off + t_len, :]
        h = jax.nn.relu(aff(acc, lyr["aff_w"], lyr["aff_b"]))
    o1 = aff(aff(h, params["out1a_w"], params["out1a_b"]),
             params["out1b_w"], params["out1b_b"])
    o2 = aff(aff(h, params["out2a_w"], params["out2a_b"]),
             params["out2b_w"], params["out2b_b"])
    lp1 = jax.nn.log_softmax(
        jnp.einsum("btd,dv->btv", o1, params["ctc_w"]) + params["ctc_b"], axis=-1)
    lp2 = jax.nn.log_softmax(
        jnp.einsum("btd,dv->btv", o2, params["ctc2_w"]) + params["ctc2_b"], axis=-1)
    return lp1, lp2


# ----------------------------------------------------------------------------- #
# Deterministic parameter init
# ----------------------------------------------------------------------------- #
def init_params(key):
    ks = iter(jax.random.split(key, 64))

    def w(shape, scale=0.1):
        return (scale * jax.random.normal(next(ks), shape)).astype(jnp.float32)

    params = {
        "in_w1": w((D_IN, INPUT_AFFINE_DIM)),
        "in_b1": w((INPUT_AFFINE_DIM,)),
        "in_w2": w((INPUT_AFFINE_DIM, LINEAR_DIM)),
        "in_b2": w((LINEAR_DIM,)),
        "fsmn_layers": [],
        "out1a_w": w((LINEAR_DIM, OUTPUT_AFFINE_DIM)),
        "out1a_b": w((OUTPUT_AFFINE_DIM,)),
        "out1b_w": w((OUTPUT_AFFINE_DIM, OUT_DIM1)),
        "out1b_b": w((OUT_DIM1,)),
        "out2a_w": w((LINEAR_DIM, OUTPUT_AFFINE_DIM)),
        "out2a_b": w((OUTPUT_AFFINE_DIM,)),
        "out2b_w": w((OUTPUT_AFFINE_DIM, OUT_DIM2)),
        "out2b_b": w((OUT_DIM2,)),
        "ctc_w": w((OUT_DIM1, VOCAB1)),
        "ctc_b": w((VOCAB1,)),
        "ctc2_w": w((OUT_DIM2, VOCAB2)),
        "ctc2_b": w((VOCAB2,)),
    }
    for _ in range(FSMN_LAYERS):
        params["fsmn_layers"].append({
            "lin_w": w((LINEAR_DIM, PROJ_DIM)),      # LinearTransform: no bias
            "mem_wl": w((LORDER, PROJ_DIM)),
            "mem_wr": w((RORDER, PROJ_DIM)),
            "aff_w": w((PROJ_DIM, LINEAR_DIM)),
            "aff_b": w((LINEAR_DIM,)),
        })
    return params


# ----------------------------------------------------------------------------- #
# Main
# ----------------------------------------------------------------------------- #
if __name__ == "__main__":
    root = jax.random.PRNGKey(0)
    kp, kx = jax.random.split(root)
    params = init_params(kp)

    speech = jax.random.normal(kx, (B, T, D_IN), dtype=jnp.float32)
    speech_lengths = jnp.array([T, T - 4], dtype=jnp.int32)

    text = jnp.array([[3, 5, 7, 2],
                      [1, 4, 6, IGNORE_ID]], dtype=jnp.int32)
    text_lengths = jnp.array([4, 3], dtype=jnp.int32)

    text2 = jnp.array([[2, 8, 3, IGNORE_ID],
                       [5, 9, IGNORE_ID, IGNORE_ID]], dtype=jnp.int32)
    text2_lengths = jnp.array([3, 2], dtype=jnp.int32)

    fwd = jax.jit(fsmn_kws_mt_forward)
    loss, stats, weight = fwd(params, speech, speech_lengths,
                              text, text_lengths, text2, text2_lengths)

    loss = jax.block_until_ready(loss)
    jax.block_until_ready(stats["loss_ctc"])
    jax.block_until_ready(stats["loss_ctc2"])
    jax.block_until_ready(weight)

    # Validate the fused Pallas kernel against a plain-JAX reference of the encoder,
    # both gridless-equivalent (single block) and with a multi-step row grid.
    lp1_ref, lp2_ref = reference_logprobs(params, speech)
    for br in (None, T):                                  # auto block and block_rows=T
        lp1, lp2 = fused_encoder_ctc_logprobs(params, speech, block_rows=br)
        err = max(float(jnp.max(jnp.abs(lp1 - lp1_ref))),
                  float(jnp.max(jnp.abs(lp2 - lp2_ref))))
        assert err < 2e-3, f"fused kernel mismatch (block_rows={br}): max diff = {err}"
    assert jnp.isfinite(loss), "loss is not finite"
    print("KERNEL_OK")
</pallas_src>

<mosaic_0001>
module attributes {stable_mosaic.version = 11 : i64} {
  func.func @_fused_kernel(%arg0: i32, %arg1: memref<32x32xf32, #tpu.memory_space<vmem>>, %arg2: memref<312x128xf32, #tpu.memory_space<vmem>>, %arg3: memref<32x128xf32, #tpu.memory_space<vmem>>) attributes {dimension_semantics = [#tpu.dimension_semantics<parallel>], iteration_bounds = array<i64: 1>, scalar_prefetch = 0 : i64, scratch_operands = 0 : i64, tpu.core_type = #tpu.core_type<tc>, window_params = [{transform_indices = @transform_0, window_bounds = array<i64: 32, 32>}, {pipeline_mode = #tpu.pipeline_mode<synchronous>, transform_indices = @transform_1, window_bounds = array<i64: 312, 128>}, {transform_indices = @transform_2, window_bounds = array<i64: 32, 128>}]} {
    %c0 = arith.constant 0 : index
    %c0_0 = arith.constant 0 : index
    %0 = vector.load %arg1[%c0, %c0_0] : memref<32x32xf32, #tpu.memory_space<vmem>>, vector<32x32xf32>
    %c24 = arith.constant 24 : index
    %c0_1 = arith.constant 0 : index
    %1 = vector.load %arg2[%c24, %c0_1] : memref<312x128xf32, #tpu.memory_space<vmem>>, vector<32x64xf32>
    %c0_2 = arith.constant 0 : index
    %c0_3 = arith.constant 0 : index
    %2 = vector.load %arg2[%c0_2, %c0_3] : memref<312x128xf32, #tpu.memory_space<vmem>>, vector<1x64xf32>
    %cst = arith.constant dense<0.000000e+00> : vector<32x64xf32>
    %3 = tpu.matmul %0, %1, %cst {dimension_numbers = #tpu.dot_dimension_numbers<[1], [0], [0], [1], [0, 0, 1, 1], [], []>} : vector<32x32xf32>, vector<32x64xf32>, vector<32x64xf32> -> vector<32x64xf32>
    %4 = vector.broadcast %2 : vector<1x64xf32> to vector<32x64xf32>
    %5 = arith.addf %3, %4 : vector<32x64xf32>
    %cst_4 = arith.constant 0.000000e+00 : f32
    %6 = vector.broadcast %cst_4 : f32 to vector<32x64xf32>
    %7 = arith.maximumf %5, %6 : vector<32x64xf32>
    %8 = tpu.iota {dimensions = array<i32: 0>} : vector<32x1xi32>
    %c16_i32 = arith.constant 16 : i32
    %c0_i32 = arith.constant 0 : i32
    %9 = arith.cmpi eq, %c16_i32, %c0_i32 : i32
    %c1_i32 = arith.constant 1 : i32
    %10 = arith.select %9, %c1_i32, %c16_i32 : i32
    %11 = vector.broadcast %10 : i32 to vector<32x1xi32>
    %12 = arith.remsi %8, %11 : vector<32x1xi32>
    %c0_i32_5 = arith.constant 0 : i32
    %13 = vector.broadcast %c0_i32_5 : i32 to vector<32x1xi32>
    %14 = arith.cmpi ne, %12, %13 : vector<32x1xi32>
    %c0_i32_6 = arith.constant 0 : i32
    %15 = vector.broadcast %c0_i32_6 : i32 to vector<32x1xi32>
    %16 = arith.cmpi slt, %12, %15 : vector<32x1xi32>
    %c0_i32_7 = arith.constant 0 : i32
    %17 = arith.cmpi slt, %10, %c0_i32_7 : i32
    %18 = vector.broadcast %17 : i1 to vector<32x1xi1>
    %19 = vector.broadcast %18 : vector<32x1xi1> to vector<32x1xi1>
    %20 = arith.xori %16, %19 : vector<32x1xi1>
    %21 = arith.andi %20, %14 : vector<32x1xi1>
    %22 = vector.broadcast %10 : i32 to vector<32x1xi32>
    %23 = arith.addi %12, %22 : vector<32x1xi32>
    %24 = arith.select %21, %23, %12 : vector<32x1xi1>, vector<32x1xi32>
    %c56 = arith.constant 56 : index
    %c0_8 = arith.constant 0 : index
    %25 = vector.load %arg2[%c56, %c0_8] : memref<312x128xf32, #tpu.memory_space<vmem>>, vector<64x32xf32>
    %c120 = arith.constant 120 : index
    %c0_9 = arith.constant 0 : index
    %26 = vector.load %arg2[%c120, %c0_9] : memref<312x128xf32, #tpu.memory_space<vmem>>, vector<32x64xf32>
    %c1 = arith.constant 1 : index
    %c0_10 = arith.constant 0 : index
    %27 = vector.load %arg2[%c1, %c0_10] : memref<312x128xf32, #tpu.memory_space<vmem>>, vector<1x64xf32>
    %c8 = arith.constant 8 : index
    %c0_11 = arith.constant 0 : index
    %28 = vector.load %arg2[%c8, %c0_11] : memref<312x128xf32, #tpu.memory_space<vmem>>, vector<8x32xf32>
    %cst_12 = arith.constant dense<0.000000e+00> : vector<32x32xf32>
    %29 = tpu.matmul %7, %25, %cst_12 {dimension_numbers = #tpu.dot_dimension_numbers<[1], [0], [0], [1], [0, 0, 1, 1], [], []>} : vector<32x64xf32>, vector<64x32xf32>, vector<32x32xf32> -> vector<32x32xf32>
    %30 = vector.extract_strided_slice %28 {offsets = [0, 0], sizes = [1, 32], strides = [1, 1]} : vector<8x32xf32> to vector<1x32xf32>
    %31 = vector.broadcast %30 : vector<1x32xf32> to vector<32x32xf32>
    %32 = arith.mulf %29, %31 : vector<32x32xf32>
    %c2_i32 = arith.constant 2 : i32
    %33 = tpu.dynamic_rotate %29 by %c2_i32 dim 0 : vector<32x32xf32>, i32 -> vector<32x32xf32>
    %c2_i32_13 = arith.constant 2 : i32
    %34 = vector.broadcast %c2_i32_13 : i32 to vector<32x1xi32>
    %35 = arith.cmpi sge, %24, %34 : vector<32x1xi32>
    %cst_14 = arith.constant 0.000000e+00 : f32
    %36 = vector.shape_cast %35 : vector<32x1xi1> to vector<32x1xi1>
    %37 = vector.broadcast %36 : vector<32x1xi1> to vector<32x32xi1>
    %38 = vector.broadcast %cst_14 : f32 to vector<32x32xf32>
    %39 = arith.select %37, %33, %38 : vector<32x32xi1>, vector<32x32xf32>
    %40 = vector.extract_strided_slice %28 {offsets = [1, 0], sizes = [1, 32], strides = [1, 1]} : vector<8x32xf32> to vector<1x32xf32>
    %41 = vector.broadcast %40 : vector<1x32xf32> to vector<32x32xf32>
    %42 = arith.mulf %41, %39 : vector<32x32xf32>
    %43 = arith.addf %32, %42 : vector<32x32xf32>
    %c1_i32_15 = arith.constant 1 : i32
    %44 = tpu.dynamic_rotate %29 by %c1_i32_15 dim 0 : vector<32x32xf32>, i32 -> vector<32x32xf32>
    %c1_i32_16 = arith.constant 1 : i32
    %45 = vector.broadcast %c1_i32_16 : i32 to vector<32x1xi32>
    %46 = arith.cmpi sge, %24, %45 : vector<32x1xi32>
    %cst_17 = arith.constant 0.000000e+00 : f32
    %47 = vector.shape_cast %46 : vector<32x1xi1> to vector<32x1xi1>
    %48 = vector.broadcast %47 : vector<32x1xi1> to vector<32x32xi1>
    %49 = vector.broadcast %cst_17 : f32 to vector<32x32xf32>
    %50 = arith.select %48, %44, %49 : vector<32x32xi1>, vector<32x32xf32>
    %51 = vector.extract_strided_slice %28 {offsets = [2, 0], sizes = [1, 32], strides = [1, 1]} : vector<8x32xf32> to vector<1x32xf32>
    %52 = vector.broadcast %51 : vector<1x32xf32> to vector<32x32xf32>
    %53 = arith.mulf %52, %50 : vector<32x32xf32>
    %54 = arith.addf %43, %53 : vector<32x32xf32>
    %c31_i32 = arith.constant 31 : i32
    %55 = tpu.dynamic_rotate %29 by %c31_i32 dim 0 : vector<32x32xf32>, i32 -> vector<32x32xf32>
    %c15_i32 = arith.constant 15 : i32
    %56 = vector.broadcast %c15_i32 : i32 to vector<32x1xi32>
    %57 = arith.cmpi slt, %24, %56 : vector<32x1xi32>
    %cst_18 = arith.constant 0.000000e+00 : f32
    %58 = vector.shape_cast %57 : vector<32x1xi1> to vector<32x1xi1>
    %59 = vector.broadcast %58 : vector<32x1xi1> to vector<32x32xi1>
    %60 = vector.broadcast %cst_18 : f32 to vector<32x32xf32>
    %61 = arith.select %59, %55, %60 : vector<32x32xi1>, vector<32x32xf32>
    %62 = vector.extract_strided_slice %28 {offsets = [3, 0], sizes = [1, 32], strides = [1, 1]} : vector<8x32xf32> to vector<1x32xf32>
    %63 = vector.broadcast %62 : vector<1x32xf32> to vector<32x32xf32>
    %64 = arith.mulf %63, %61 : vector<32x32xf32>
    %65 = arith.addf %54, %64 : vector<32x32xf32>
    %cst_19 = arith.constant dense<0.000000e+00> : vector<32x64xf32>
    %66 = tpu.matmul %65, %26, %cst_19 {dimension_numbers = #tpu.dot_dimension_numbers<[1], [0], [0], [1], [0, 0, 1, 1], [], []>} : vector<32x32xf32>, vector<32x64xf32>, vector<32x64xf32> -> vector<32x64xf32>
    %67 = vector.broadcast %27 : vector<1x64xf32> to vector<32x64xf32>
    %68 = arith.addf %66, %67 : vector<32x64xf32>
    %cst_20 = arith.constant 0.000000e+00 : f32
    %69 = vector.broadcast %cst_20 : f32 to vector<32x64xf32>
    %70 = arith.maximumf %68, %69 : vector<32x64xf32>
    %c152 = arith.constant 152 : index
    %c0_21 = arith.constant 0 : index
    %71 = vector.load %arg2[%c152, %c0_21] : memref<312x128xf32, #tpu.memory_space<vmem>>, vector<64x32xf32>
    %c216 = arith.constant 216 : index
    %c0_22 = arith.constant 0 : index
    %72 = vector.load %arg2[%c216, %c0_22] : memref<312x128xf32, #tpu.memory_space<vmem>>, vector<32x64xf32>
    %c2 = arith.constant 2 : index
    %c0_23 = arith.constant 0 : index
    %73 = vector.load %arg2[%c2, %c0_23] : memref<312x128xf32, #tpu.memory_space<vmem>>, vector<1x64xf32>
    %c16 = arith.constant 16 : index
    %c0_24 = arith.constant 0 : index
    %74 = vector.load %arg2[%c16, %c0_24] : memref<312x128xf32, #tpu.memory_space<vmem>>, vector<8x32xf32>
    %cst_25 = arith.constant dense<0.000000e+00> : vector<32x32xf32>
    %75 = tpu.matmul %70, %71, %cst_25 {dimension_numbers = #tpu.dot_dimension_numbers<[1], [0], [0], [1], [0, 0, 1, 1], [], []>} : vector<32x64xf32>, vector<64x32xf32>, vector<32x32xf32> -> vector<32x32xf32>
    %76 = vector.extract_strided_slice %74 {offsets = [0, 0], sizes = [1, 32], strides = [1, 1]} : vector<8x32xf32> to vector<1x32xf32>
    %77 = vector.broadcast %76 : vector<1x32xf32> to vector<32x32xf32>
    %78 = arith.mulf %75, %77 : vector<32x32xf32>
    %c2_i32_26 = arith.constant 2 : i32
    %79 = tpu.dynamic_rotate %75 by %c2_i32_26 dim 0 : vector<32x32xf32>, i32 -> vector<32x32xf32>
    %c2_i32_27 = arith.constant 2 : i32
    %80 = vector.broadcast %c2_i32_27 : i32 to vector<32x1xi32>
    %81 = arith.cmpi sge, %24, %80 : vector<32x1xi32>
    %cst_28 = arith.constant 0.000000e+00 : f32
    %82 = vector.shape_cast %81 : vector<32x1xi1> to vector<32x1xi1>
    %83 = vector.broadcast %82 : vector<32x1xi1> to vector<32x32xi1>
    %84 = vector.broadcast %cst_28 : f32 to vector<32x32xf32>
    %85 = arith.select %83, %79, %84 : vector<32x32xi1>, vector<32x32xf32>
    %86 = vector.extract_strided_slice %74 {offsets = [1, 0], sizes = [1, 32], strides = [1, 1]} : vector<8x32xf32> to vector<1x32xf32>
    %87 = vector.broadcast %86 : vector<1x32xf32> to vector<32x32xf32>
    %88 = arith.mulf %87, %85 : vector<32x32xf32>
    %89 = arith.addf %78, %88 : vector<32x32xf32>
    %c1_i32_29 = arith.constant 1 : i32
    %90 = tpu.dynamic_rotate %75 by %c1_i32_29 dim 0 : vector<32x32xf32>, i32 -> vector<32x32xf32>
    %c1_i32_30 = arith.constant 1 : i32
    %91 = vector.broadcast %c1_i32_30 : i32 to vector<32x1xi32>
    %92 = arith.cmpi sge, %24, %91 : vector<32x1xi32>
    %cst_31 = arith.constant 0.000000e+00 : f32
    %93 = vector.shape_cast %92 : vector<32x1xi1> to vector<32x1xi1>
    %94 = vector.broadcast %93 : vector<32x1xi1> to vector<32x32xi1>
    %95 = vector.broadcast %cst_31 : f32 to vector<32x32xf32>
    %96 = arith.select %94, %90, %95 : vector<32x32xi1>, vector<32x32xf32>
    %97 = vector.extract_strided_slice %74 {offsets = [2, 0], sizes = [1, 32], strides = [1, 1]} : vector<8x32xf32> to vector<1x32xf32>
    %98 = vector.broadcast %97 : vector<1x32xf32> to vector<32x32xf32>
    %99 = arith.mulf %98, %96 : vector<32x32xf32>
    %100 = arith.addf %89, %99 : vector<32x32xf32>
    %c31_i32_32 = arith.constant 31 : i32
    %101 = tpu.dynamic_rotate %75 by %c31_i32_32 dim 0 : vector<32x32xf32>, i32 -> vector<32x32xf32>
    %c15_i32_33 = arith.constant 15 : i32
    %102 = vector.broadcast %c15_i32_33 : i32 to vector<32x1xi32>
    %103 = arith.cmpi slt, %24, %102 : vector<32x1xi32>
    %cst_34 = arith.constant 0.000000e+00 : f32
    %104 = vector.shape_cast %103 : vector<32x1xi1> to vector<32x1xi1>
    %105 = vector.broadcast %104 : vector<32x1xi1> to vector<32x32xi1>
    %106 = vector.broadcast %cst_34 : f32 to vector<32x32xf32>
    %107 = arith.select %105, %101, %106 : vector<32x32xi1>, vector<32x32xf32>
    %108 = vector.extract_strided_slice %74 {offsets = [3, 0], sizes = [1, 32], strides = [1, 1]} : vector<8x32xf32> to vector<1x32xf32>
    %109 = vector.broadcast %108 : vector<1x32xf32> to vector<32x32xf32>
    %110 = arith.mulf %109, %107 : vector<32x32xf32>
    %111 = arith.addf %100, %110 : vector<32x32xf32>
    %cst_35 = arith.constant dense<0.000000e+00> : vector<32x64xf32>
    %112 = tpu.matmul %111, %72, %cst_35 {dimension_numbers = #tpu.dot_dimension_numbers<[1], [0], [0], [1], [0, 0, 1, 1], [], []>} : vector<32x32xf32>, vector<32x64xf32>, vector<32x64xf32> -> vector<32x64xf32>
    %113 = vector.broadcast %73 : vector<1x64xf32> to vector<32x64xf32>
    %114 = arith.addf %112, %113 : vector<32x64xf32>
    %cst_36 = arith.constant 0.000000e+00 : f32
    %115 = vector.broadcast %cst_36 : f32 to vector<32x64xf32>
    %116 = arith.maximumf %114, %115 : vector<32x64xf32>
    %c248 = arith.constant 248 : index
    %c0_37 = arith.constant 0 : index
    %117 = vector.load %arg2[%c248, %c0_37] : memref<312x128xf32, #tpu.memory_space<vmem>>, vector<64x128xf32>
    %c3 = arith.constant 3 : index
    %c0_38 = arith.constant 0 : index
    %118 = vector.load %arg2[%c3, %c0_38] : memref<312x128xf32, #tpu.memory_space<vmem>>, vector<1x128xf32>
    %cst_39 = arith.constant dense<0.000000e+00> : vector<32x128xf32>
    %119 = tpu.matmul %116, %117, %cst_39 {dimension_numbers = #tpu.dot_dimension_numbers<[1], [0], [0], [1], [0, 0, 1, 1], [], []>} : vector<32x64xf32>, vector<64x128xf32>, vector<32x128xf32> -> vector<32x128xf32>
    %120 = vector.broadcast %118 : vector<1x128xf32> to vector<32x128xf32>
    %121 = arith.addf %119, %120 : vector<32x128xf32>
    %122 = tpu.iota {dimensions = array<i32: 1>} : vector<32x128xi32>
    %c16_i32_40 = arith.constant 16 : i32
    %123 = vector.broadcast %c16_i32_40 : i32 to vector<32x128xi32>
    %124 = arith.cmpi slt, %122, %123 : vector<32x128xi32>
    %c28_i32 = arith.constant 28 : i32
    %125 = vector.broadcast %c28_i32 : i32 to vector<32x128xi32>
    %126 = arith.cmpi slt, %122, %125 : vector<32x128xi32>
    %cst_41 = arith.constant -1.000000e+30 : f32
    %127 = vector.broadcast %cst_41 : f32 to vector<32x128xf32>
    %128 = arith.select %124, %121, %127 : vector<32x128xi1>, vector<32x128xf32>
    %cst_42 = arith.constant dense<0xFF800000> : vector<32xf32>
    %129 = vector.multi_reduction <maximumf>, %128, %cst_42 [1] : vector<32x128xf32> to vector<32xf32>
    %130 = vector.shape_cast %129 : vector<32xf32> to vector<32x1xf32>
    %cst_43 = arith.constant dense<true> : vector<32x128xi1>
    %131 = arith.xori %124, %cst_43 : vector<32x128xi1>
    %132 = arith.andi %126, %131 : vector<32x128xi1>
    %cst_44 = arith.constant -1.000000e+30 : f32
    %133 = vector.broadcast %cst_44 : f32 to vector<32x128xf32>
    %134 = arith.select %132, %121, %133 : vector<32x128xi1>, vector<32x128xf32>
    %cst_45 = arith.constant dense<0xFF800000> : vector<32xf32>
    %135 = vector.multi_reduction <maximumf>, %134, %cst_45 [1] : vector<32x128xf32> to vector<32xf32>
    %136 = vector.shape_cast %135 : vector<32xf32> to vector<32x1xf32>
    %137 = vector.shape_cast %130 : vector<32x1xf32> to vector<32x1xf32>
    %138 = vector.broadcast %137 : vector<32x1xf32> to vector<32x128xf32>
    %139 = vector.shape_cast %136 : vector<32x1xf32> to vector<32x1xf32>
    %140 = vector.broadcast %139 : vector<32x1xf32> to vector<32x128xf32>
    %141 = arith.select %124, %138, %140 : vector<32x128xi1>, vector<32x128xf32>
    %142 = arith.subf %121, %141 : vector<32x128xf32>
    %cst_46 = arith.constant -1.000000e+30 : f32
    %143 = vector.broadcast %cst_46 : f32 to vector<32x128xf32>
    %144 = arith.select %126, %142, %143 : vector<32x128xi1>, vector<32x128xf32>
    %145 = math.exp %144 : vector<32x128xf32>
    %cst_47 = arith.constant 0.000000e+00 : f32
    %146 = vector.broadcast %cst_47 : f32 to vector<32x128xf32>
    %147 = arith.select %124, %145, %146 : vector<32x128xi1>, vector<32x128xf32>
    %cst_48 = arith.constant dense<0.000000e+00> : vector<32xf32>
    %148 = vector.multi_reduction <add>, %147, %cst_48 [1] : vector<32x128xf32> to vector<32xf32>
    %149 = vector.shape_cast %148 : vector<32xf32> to vector<32x1xf32>
    %cst_49 = arith.constant 0.000000e+00 : f32
    %150 = vector.broadcast %cst_49 : f32 to vector<32x128xf32>
    %151 = arith.select %124, %150, %145 : vector<32x128xi1>, vector<32x128xf32>
    %cst_50 = arith.constant dense<0.000000e+00> : vector<32xf32>
    %152 = vector.multi_reduction <add>, %151, %cst_50 [1] : vector<32x128xf32> to vector<32xf32>
    %153 = vector.shape_cast %152 : vector<32xf32> to vector<32x1xf32>
    %154 = math.log %149 : vector<32x1xf32>
    %155 = math.log %153 : vector<32x1xf32>
    %156 = vector.shape_cast %154 : vector<32x1xf32> to vector<32x1xf32>
    %157 = vector.broadcast %156 : vector<32x1xf32> to vector<32x128xf32>
    %158 = vector.shape_cast %155 : vector<32x1xf32> to vector<32x1xf32>
    %159 = vector.broadcast %158 : vector<32x1xf32> to vector<32x128xf32>
    %160 = arith.select %124, %157, %159 : vector<32x128xi1>, vector<32x128xf32>
    %161 = arith.subf %121, %141 : vector<32x128xf32>
    %162 = arith.subf %161, %160 : vector<32x128xf32>
    %cst_51 = arith.constant 0.000000e+00 : f32
    %163 = vector.broadcast %cst_51 : f32 to vector<32x128xf32>
    %164 = arith.select %126, %162, %163 : vector<32x128xi1>, vector<32x128xf32>
    %c0_52 = arith.constant 0 : index
    %c0_53 = arith.constant 0 : index
    %165 = vector.load %arg3[%c0_52, %c0_53] : memref<32x128xf32, #tpu.memory_space<vmem>>, vector<32x128xf32>
    tpu.vector_store %arg3[%c0_52, %c0_53], %164 {strides = array<i32>} : memref<32x128xf32, #tpu.memory_space<vmem>>, vector<32x128xf32>,
    return
  }
  func.func @transform_0(%arg0: i32) -> (i32, i32) {
    %c0_i32 = arith.constant 0 : i32
    %c0_i32_0 = arith.constant 0 : i32
    return %arg0, %c0_i32 : i32, i32
  }
  func.func @transform_1(%arg0: i32) -> (i32, i32) {
    %c0_i32 = arith.constant 0 : i32
    %c0_i32_0 = arith.constant 0 : i32
    %c0_i32_1 = arith.constant 0 : i32
    return %c0_i32, %c0_i32_0 : i32, i32
  }
  func.func @transform_2(%arg0: i32) -> (i32, i32) {
    %c0_i32 = arith.constant 0 : i32
    %c0_i32_0 = arith.constant 0 : i32
    return %arg0, %c0_i32 : i32, i32
  }
}

</mosaic_0001>

<llo_original>
// kernel: fsmn_kws_mt_forward.1
$region0: #{fsmn_kws_mt_forward.1}
  #allocation0 [shape = 'u32[]', space=smem, size = 0x4, offset = 0x4, fixed_abs, tag = 'smem constant byte address 0x4 - core index']
  #allocation1 [shape = 'u32[72,128]{1,0:T(1,128)}', space=vmem, size = 0x9000, scoped, tag = 'internal scratch']
  %s0 = inlined_call_operand.vmem [shape: f32[32,32], index: 0, kind: input, shape index: {}]
  %s1 = inlined_call_operand.vmem [shape: f32[312,128], index: 1, kind: input, shape index: {}]
  %s2 = inlined_call_operand.vmem [shape: f32[32,128], index: 2, kind: output, shape index: {}]
  %s3 = sld [smem:[#allocation0]]
  $region18: #{fsmn_kws_mt_forward.1} parent=0
    _
  %s5 = ssub.s32 1, %s3
  %s6 = scalar_select 0, %s5, %s3
  // Predicated region
  $region2: #{fsmn_kws_mt_forward.1} parent=0 // pred_check
    _
  $region3: #{fsmn_kws_mt_forward.1} parent=0 // pred_check_branch
    %8 = sbr.rel (0) target = $region5
  $region4: #{fsmn_kws_mt_forward.1} parent=0 // pred_region
    _
  $region5: #{fsmn_kws_mt_forward.1} parent=0 // pred_fallthru
    _
  // Predicated region
  $region6: #{fsmn_kws_mt_forward.1} parent=0 // pred_check
    _
  $region7: #{fsmn_kws_mt_forward.1} parent=0 // pred_check_branch
    %10 = sbr.rel (0) target = $region9
  $region8: #{fsmn_kws_mt_forward.1} parent=0 // pred_region
    _
  $region9: #{fsmn_kws_mt_forward.1} parent=0 // pred_fallthru
    _
  %v11 = vld [vmem:[%s0] sm:$0xff]
  %v12 = vld [vmem:[%s0 + $0x8] sm:$0xff]
  %v13 = vld [vmem:[%s0 + $0x10] sm:$0xff]
  %v14 = vld [vmem:[%s0 + $0x18] sm:$0xff]
  %v15 = vld [vmem:[%s1 + $0x18] sm:$0xff]
  %v16 = vld [vmem:[%s1 + $0x20] sm:$0xff]
  %v17 = vld [vmem:[%s1 + $0x28] sm:$0xff]
  %v18 = vld [vmem:[%s1 + $0x30] sm:$0xff]
  %v19 = vld [vmem:[%s1] sm:$0x1]
  %v20 = vperm.slane %v19, 0
  %vm21 = vcmask 261120
  %v23 = vsel %vm21, %v11, 0
  %v26 = vsel %vm21, %v12, 0
  %v29 = vsel %vm21, %v13, 0
  %v32 = vsel %vm21, %v14, 0
  %34 = vmatpush.msra.mxu0 0.0
  %35 = vmatpush.msra.mxu0 0.0
  %36 = vmatpush.msra.mxu0 0.0
  %37 = vmatpush.msra.mxu0 0.0
  %38 = vmatpush.msra.mxu0 0.0
  %39 = vmatpush.msra.mxu0 0.0
  %40 = vmatpush.msra.mxu0 0.0
  %41 = vmatpush.msra.mxu0 0.0
  %42 = vmatpush.msra.mxu0 0.0
  %43 = vmatpush.msra.mxu0 0.0
  %44 = vmatpush.msra.mxu0 0.0
  %45 = vmatpush.msra.mxu0 0.0
  %46 = vmatpush.msra.mxu0 %v18
  %47 = vmatpush.msra.mxu0 %v17
  %48 = vmatpush.msra.mxu0 %v16
  %49 = vmatpush.msra.mxu0 %v15
  %50 = vmatmul.f32.gmra.mxu0 %v23
  %v51 = vpop.f32.mrf.mxu0
  %v52 = vadd.f32 %v20, %v51
  %53 = vmatmul.f32.gmra.mxu0 %v26
  %v54 = vpop.f32.mrf.mxu0
  %v55 = vadd.f32 %v20, %v54
  %56 = vmatmul.f32.gmra.mxu0 %v29
  %v57 = vpop.f32.mrf.mxu0
  %v58 = vadd.f32 %v20, %v57
  %59 = vmatmul.f32.gmra.mxu0 %v32
  %v60 = vpop.f32.mrf.mxu0
  %v61 = vadd.f32 %v20, %v60
  %62 = vdwg.mxu0
  %v63 = vmax.f32 %v52, 0.0
  %v64 = vmax.f32 %v55, 0.0
  %v65 = vmax.f32 %v58, 0.0
  %v66 = vmax.f32 %v61, 0.0
  %v67 = vlaneseq
  %v68 = vshrl.u32 %v67, 7
  %v69 = vadd.s32 %v68, 8
  %v70 = vadd.s32 %v68, 16
  %v71 = vadd.s32 %v68, 24
  %vm72 = vcmp.lt.s32.totalorder %v68, 0
  %v73 = vsub.s32 0, %v68
  %v74 = vsel %vm72, %v73, %v68
  %v75 = vshrl.u32 %v74, 4
  %v76 = vand.u32 %v74, 15
  %v77 = vsub.s32 0, %v76
  %v78 = vsel %vm72, %v77, %v76
  %vm79 = vcmp.lt.s32.totalorder %v69, 0
  %v80 = vsub.s32 0, %v69
  %v81 = vsel %vm79, %v80, %v69
  %v82 = vshrl.u32 %v81, 4
  %v83 = vand.u32 %v81, 15
  %v84 = vsub.s32 0, %v83
  %v85 = vsel %vm79, %v84, %v83
  %vm86 = vcmp.lt.s32.totalorder %v70, 0
  %v87 = vsub.s32 0, %v70
  %v88 = vsel %vm86, %v87, %v70
  %v89 = vshrl.u32 %v88, 4
  %v90 = vand.u32 %v88, 15
  %v91 = vsub.s32 0, %v90
  %v92 = vsel %vm86, %v91, %v90
  %vm93 = vcmp.lt.s32.totalorder %v71, 0
  %v94 = vsub.s32 0, %v71
  %v95 = vsel %vm93, %v94, %v71
  %v96 = vshrl.u32 %v95, 4
  %v97 = vand.u32 %v95, 15
  %v98 = vsub.s32 0, %v97
  %v99 = vsel %vm93, %v98, %v97
  %vm100 = vcmp.ne.s32.totalorder %v78, 0
  %vm101 = vcmp.ne.s32.totalorder %v85, 0
  %vm102 = vcmp.ne.s32.totalorder %v92, 0
  %vm103 = vcmp.ne.s32.totalorder %v99, 0
  %vm104 = vcmp.lt.s32.totalorder %v78, 0
  %vm105 = vcmp.lt.s32.totalorder %v85, 0
  %vm106 = vcmp.lt.s32.totalorder %v92, 0
  %vm107 = vcmp.lt.s32.totalorder %v99, 0
  %vm108 = vmand %vm104, %vm100
  %vm109 = vmand %vm105, %vm101
  %vm110 = vmand %vm106, %vm102
  %vm111 = vmand %vm107, %vm103
  %v112 = vadd.s32 %v78, 16
  %v113 = vadd.s32 %v85, 16
  %v114 = vadd.s32 %v92, 16
  %v115 = vadd.s32 %v99, 16
  %v116 = vsel %vm108, %v112, %v78
  %v117 = vsel %vm109, %v113, %v85
  %v118 = vsel %vm110, %v114, %v92
  %v119 = vsel %vm111, %v115, %v99
  %v120 = vld [vmem:[%s1 + $0x38] sm:$0xff]
  %v121 = vld [vmem:[%s1 + $0x40] sm:$0xff]
  %v122 = vld [vmem:[%s1 + $0x48] sm:$0xff]
  %v123 = vld [vmem:[%s1 + $0x50] sm:$0xff]
  %v124 = vld [vmem:[%s1 + $0x58] sm:$0xff]
  %v125 = vld [vmem:[%s1 + $0x60] sm:$0xff]
  %v126 = vld [vmem:[%s1 + $0x68] sm:$0xff]
  %v127 = vld [vmem:[%s1 + $0x70] sm:$0xff]
  %v128 = vld [vmem:[%s1 + $0x78] sm:$0xff]
  %v129 = vld [vmem:[%s1 + $0x80] sm:$0xff]
  %v130 = vld [vmem:[%s1 + $0x88] sm:$0xff]
  %v131 = vld [vmem:[%s1 + $0x90] sm:$0xff]
  %v132 = vld [vmem:[%s1 + $0x1] sm:$0x1]
  %v133 = vld [vmem:[%s1 + $0x8] sm:$0xff]
  %vm134 = vcmask 523264
  %v136 = vsel %vm134, %v63, 0
  %v139 = vsel %vm134, %v64, 0
  %v142 = vsel %vm134, %v65, 0
  %v145 = vsel %vm134, %v66, 0
  %147 = vmatpush.msra.mxu0 0.0
  %148 = vmatpush.msra.mxu0 0.0
  %149 = vmatpush.msra.mxu0 0.0
  %150 = vmatpush.msra.mxu0 0.0
  %151 = vmatpush.msra.mxu0 0.0
  %152 = vmatpush.msra.mxu0 0.0
  %153 = vmatpush.msra.mxu0 0.0
  %154 = vmatpush.msra.mxu0 0.0
  %155 = vmatpush.msra.mxu0 %v127
  %156 = vmatpush.msra.mxu0 %v126
  %157 = vmatpush.msra.mxu0 %v125
  %158 = vmatpush.msra.mxu0 %v124
  %159 = vmatpush.msra.mxu0 %v123
  %160 = vmatpush.msra.mxu0 %v122
  %161 = vmatpush.msra.mxu0 %v121
  %162 = vmatpush.msra.mxu0 %v120
  %163 = vmatmul.f32.gmra.mxu0 %v136
  %v164 = vpop.f32.mrf.mxu0
  %v165 = vadd.f32 0.0, %v164
  %166 = vmatmul.f32.gmra.mxu0 %v139
  %v167 = vpop.f32.mrf.mxu0
  %v168 = vadd.f32 0.0, %v167
  %169 = vmatmul.f32.gmra.mxu0 %v142
  %v170 = vpop.f32.mrf.mxu0
  %v171 = vadd.f32 0.0, %v170
  %172 = vmatmul.f32.gmra.mxu0 %v145
  %v173 = vpop.f32.mrf.mxu0
  %v174 = vadd.f32 0.0, %v173
  %175 = vdwg.mxu0
  %v176 = vperm.slane %v133, 0
  %v177 = vmul.f32 %v165, %v176
  %v178 = vmul.f32 %v168, %v176
  %v179 = vmul.f32 %v171, %v176
  %v180 = vmul.f32 %v174, %v176
  %v181 = vrot.slane %v165, 6
  %v182 = vrot.slane %v168, 6
  %v183 = vrot.slane %v171, 6
  %v184 = vrot.slane %v174, 6
  %vm185 = vcmp.lt.s32.totalorder %v68, 2
  %v186 = vsel %vm185, %v183, %v184
  %v187 = vsel %vm185, %v182, %v183
  %v188 = vsel %vm185, %v181, %v182
  %v189 = vsel %vm185, %v184, %v181
  %vm190 = vcmp.ge.s32.totalorder %v116, 2
  %vm191 = vcmp.ge.s32.totalorder %v117, 2
  %vm192 = vcmp.ge.s32.totalorder %v118, 2
  %vm193 = vcmp.ge.s32.totalorder %v119, 2
  %v194 = vsel %vm190, 1, 0
  %v195 = vsel %vm191, 1, 0
  %v196 = vsel %vm192, 1, 0
  %v197 = vsel %vm193, 1, 0
  %vm198 = vcmp.eq.s32.totalorder %v194, 1
  %vm199 = vcmp.eq.s32.totalorder %v195, 1
  %vm200 = vcmp.eq.s32.totalorder %v196, 1
  %vm201 = vcmp.eq.s32.totalorder %v197, 1
  %v202 = vsel %vm198, %v189, 0.0
  %v203 = vsel %vm199, %v188, 0.0
  %v204 = vsel %vm200, %v187, 0.0
  %v205 = vsel %vm201, %v186, 0.0
  %v206 = vperm.slane %v133, 1
  %v207 = vmul.f32 %v206, %v202
  %v208 = vmul.f32 %v206, %v203
  %v209 = vmul.f32 %v206, %v204
  %v210 = vmul.f32 %v206, %v205
  %v211 = vadd.f32 %v177, %v207
  %v212 = vadd.f32 %v178, %v208
  %v213 = vadd.f32 %v179, %v209
  %v214 = vadd.f32 %v180, %v210
  %v215 = vrot.slane %v165, 7
  %v216 = vrot.slane %v168, 7
  %v217 = vrot.slane %v171, 7
  %v218 = vrot.slane %v174, 7
  %vm219 = vcmp.lt.s32.totalorder %v68, 1
  %v220 = vsel %vm219, %v217, %v218
  %v221 = vsel %vm219, %v216, %v217
  %v222 = vsel %vm219, %v215, %v216
  %v223 = vsel %vm219, %v218, %v215
  %vm224 = vcmp.ge.s32.totalorder %v116, 1
  %vm225 = vcmp.ge.s32.totalorder %v117, 1
  %vm226 = vcmp.ge.s32.totalorder %v118, 1
  %vm227 = vcmp.ge.s32.totalorder %v119, 1
  %v228 = vsel %vm224, 1, 0
  %v229 = vsel %vm225, 1, 0
  %v230 = vsel %vm226, 1, 0
  %v231 = vsel %vm227, 1, 0
  %vm232 = vcmp.eq.s32.totalorder %v228, 1
  %vm233 = vcmp.eq.s32.totalorder %v229, 1
  %vm234 = vcmp.eq.s32.totalorder %v230, 1
  %vm235 = vcmp.eq.s32.totalorder %v231, 1
  %v236 = vsel %vm232, %v223, 0.0
  %v237 = vsel %vm233, %v222, 0.0
  %v238 = vsel %vm234, %v221, 0.0
  %v239 = vsel %vm235, %v220, 0.0
  %v240 = vperm.slane %v133, 2
  %v241 = vmul.f32 %v240, %v236
  %v242 = vmul.f32 %v240, %v237
  %v243 = vmul.f32 %v240, %v238
  %v244 = vmul.f32 %v240, %v239
  %v245 = vadd.f32 %v211, %v241
  %v246 = vadd.f32 %v212, %v242
  %v247 = vadd.f32 %v213, %v243
  %v248 = vadd.f32 %v214, %v244
  %v249 = vrot.slane %v165, 1
  %v250 = vrot.slane %v168, 1
  %v251 = vrot.slane %v171, 1
  %v252 = vrot.slane %v174, 1
  %vm253 = vcmp.lt.s32.totalorder %v68, 7
  %v254 = vsel %vm253, %v251, %v252
  %v255 = vsel %vm253, %v250, %v251
  %v256 = vsel %vm253, %v249, %v250
  %v257 = vsel %vm253, %v252, %v249
  %vm258 = vcmp.lt.s32.totalorder %v116, 15
  %vm259 = vcmp.lt.s32.totalorder %v117, 15
  %vm260 = vcmp.lt.s32.totalorder %v118, 15
  %vm261 = vcmp.lt.s32.totalorder %v119, 15
  %v262 = vsel %vm258, 1, 0
  %v263 = vsel %vm259, 1, 0
  %v264 = vsel %vm260, 1, 0
  %v265 = vsel %vm261, 1, 0
  %vm266 = vcmp.eq.s32.totalorder %v262, 1
  %vm267 = vcmp.eq.s32.totalorder %v263, 1
  %vm268 = vcmp.eq.s32.totalorder %v264, 1
  %vm269 = vcmp.eq.s32.totalorder %v265, 1
  %v270 = vsel %vm266, %v256, 0.0
  %v271 = vsel %vm267, %v255, 0.0
  %v272 = vsel %vm268, %v254, 0.0
  %v273 = vsel %vm269, %v257, 0.0
  %v274 = vperm.slane %v133, 3
  %v275 = vmul.f32 %v274, %v270
  %v276 = vmul.f32 %v274, %v271
  %v277 = vmul.f32 %v274, %v272
  %v278 = vmul.f32 %v274, %v273
  %v279 = vadd.f32 %v245, %v275
  %v280 = vadd.f32 %v246, %v276
  %v281 = vadd.f32 %v247, %v277
  %v282 = vadd.f32 %v248, %v278
  %v283 = vperm.slane %v132, 0
  %v285 = vsel %vm21, %v279, 0
  %v288 = vsel %vm21, %v280, 0
  %v291 = vsel %vm21, %v281, 0
  %v294 = vsel %vm21, %v282, 0
  %296 = vmatpush.msra.mxu0 0.0
  %297 = vmatpush.msra.mxu0 0.0
  %298 = vmatpush.msra.mxu0 0.0
  %299 = vmatpush.msra.mxu0 0.0
  %300 = vmatpush.msra.mxu0 0.0
  %301 = vmatpush.msra.mxu0 0.0
  %302 = vmatpush.msra.mxu0 0.0
  %303 = vmatpush.msra.mxu0 0.0
  %304 = vmatpush.msra.mxu0 0.0
  %305 = vmatpush.msra.mxu0 0.0
  %306 = vmatpush.msra.mxu0 0.0
  %307 = vmatpush.msra.mxu0 0.0
  %308 = vmatpush.msra.mxu0 %v131
  %309 = vmatpush.msra.mxu0 %v130
  %310 = vmatpush.msra.mxu0 %v129
  %311 = vmatpush.msra.mxu0 %v128
  %312 = vmatmul.f32.gmra.mxu0 %v285
  %v313 = vpop.f32.mrf.mxu0
  %v314 = vadd.f32 %v283, %v313
  %315 = vmatmul.f32.gmra.mxu0 %v288
  %v316 = vpop.f32.mrf.mxu0
  %v317 = vadd.f32 %v283, %v316
  %318 = vmatmul.f32.gmra.mxu0 %v291
  %v319 = vpop.f32.mrf.mxu0
  %v320 = vadd.f32 %v283, %v319
  %321 = vmatmul.f32.gmra.mxu0 %v294
  %v322 = vpop.f32.mrf.mxu0
  %v323 = vadd.f32 %v283, %v322
  %324 = vdwg.mxu0
  %v325 = vmax.f32 %v314, 0.0
  %v326 = vmax.f32 %v317, 0.0
  %v327 = vmax.f32 %v320, 0.0
  %v328 = vmax.f32 %v323, 0.0
  %v329 = vld [vmem:[%s1 + $0x98] sm:$0xff]
  %v330 = vld [vmem:[%s1 + $0xa0] sm:$0xff]
  %v331 = vld [vmem:[%s1 + $0xa8] sm:$0xff]
  %v332 = vld [vmem:[%s1 + $0xb0] sm:$0xff]
  %v333 = vld [vmem:[%s1 + $0xb8] sm:$0xff]
  %v334 = vld [vmem:[%s1 + $0xc0] sm:$0xff]
  %v335 = vld [vmem:[%s1 + $0xc8] sm:$0xff]
  %v336 = vld [vmem:[%s1 + $0xd0] sm:$0xff]
  %v337 = vld [vmem:[%s1 + $0xd8] sm:$0xff]
  %v338 = vld [vmem:[%s1 + $0xe0] sm:$0xff]
  %v339 = vld [vmem:[%s1 + $0xe8] sm:$0xff]
  %v340 = vld [vmem:[%s1 + $0xf0] sm:$0xff]
  %v341 = vld [vmem:[%s1 + $0x2] sm:$0x1]
  %v342 = vld [vmem:[%s1 + $0x10] sm:$0xff]
  %v344 = vsel %vm134, %v325, 0
  %v347 = vsel %vm134, %v326, 0
  %v350 = vsel %vm134, %v327, 0
  %v353 = vsel %vm134, %v328, 0
  %355 = vmatpush.msra.mxu0 0.0
  %356 = vmatpush.msra.mxu0 0.0
  %357 = vmatpush.msra.mxu0 0.0
  %358 = vmatpush.msra.mxu0 0.0
  %359 = vmatpush.msra.mxu0 0.0
  %360 = vmatpush.msra.mxu0 0.0
  %361 = vmatpush.msra.mxu0 0.0
  %362 = vmatpush.msra.mxu0 0.0
  %363 = vmatpush.msra.mxu0 %v336
  %364 = vmatpush.msra.mxu0 %v335
  %365 = vmatpush.msra.mxu0 %v334
  %366 = vmatpush.msra.mxu0 %v333
  %367 = vmatpush.msra.mxu0 %v332
  %368 = vmatpush.msra.mxu0 %v331
  %369 = vmatpush.msra.mxu0 %v330
  %370 = vmatpush.msra.mxu0 %v329
  %371 = vmatmul.f32.gmra.mxu0 %v344
  %v372 = vpop.f32.mrf.mxu0
  %v373 = vadd.f32 0.0, %v372
  %374 = vmatmul.f32.gmra.mxu0 %v347
  %v375 = vpop.f32.mrf.mxu0
  %v376 = vadd.f32 0.0, %v375
  %377 = vmatmul.f32.gmra.mxu0 %v350
  %v378 = vpop.f32.mrf.mxu0
  %v379 = vadd.f32 0.0, %v378
  %380 = vmatmul.f32.gmra.mxu0 %v353
  %v381 = vpop.f32.mrf.mxu0
  %v382 = vadd.f32 0.0, %v381
  %383 = vdwg.mxu0
  %v384 = vperm.slane %v342, 0
  %v385 = vmul.f32 %v373, %v384
  %v386 = vmul.f32 %v376, %v384
  %v387 = vmul.f32 %v379, %v384
  %v388 = vmul.f32 %v382, %v384
  %v389 = vrot.slane %v373, 6
  %v390 = vrot.slane %v376, 6
  %v391 = vrot.slane %v379, 6
  %v392 = vrot.slane %v382, 6
  %v393 = vsel %vm185, %v391, %v392
  %v394 = vsel %vm185, %v390, %v391
  %v395 = vsel %vm185, %v389, %v390
  %v396 = vsel %vm185, %v392, %v389
  %v397 = vsel %vm198, %v396, 0.0
  %v398 = vsel %vm199, %v395, 0.0
  %v399 = vsel %vm200, %v394, 0.0
  %v400 = vsel %vm201, %v393, 0.0
  %v401 = vperm.slane %v342, 1
  %v402 = vmul.f32 %v401, %v397
  %v403 = vmul.f32 %v401, %v398
  %v404 = vmul.f32 %v401, %v399
  %v405 = vmul.f32 %v401, %v400
  %v406 = vadd.f32 %v385, %v402
  %v407 = vadd.f32 %v386, %v403
  %v408 = vadd.f32 %v387, %v404
  %v409 = vadd.f32 %v388, %v405
  %v410 = vrot.slane %v373, 7
  %v411 = vrot.slane %v376, 7
  %v412 = vrot.slane %v379, 7
  %v413 = vrot.slane %v382, 7
  %v414 = vsel %vm219, %v412, %v413
  %v415 = vsel %vm219, %v411, %v412
  %v416 = vsel %vm219, %v410, %v411
  %v417 = vsel %vm219, %v413, %v410
  %v418 = vsel %vm232, %v417, 0.0
  %v419 = vsel %vm233, %v416, 0.0
  %v420 = vsel %vm234, %v415, 0.0
  %v421 = vsel %vm235, %v414, 0.0
  %v422 = vperm.slane %v342, 2
  %v423 = vmul.f32 %v422, %v418
  %v424 = vmul.f32 %v422, %v419
  %v425 = vmul.f32 %v422, %v420
  %v426 = vmul.f32 %v422, %v421
  %v427 = vadd.f32 %v406, %v423
  %v428 = vadd.f32 %v407, %v424
  %v429 = vadd.f32 %v408, %v425
  %v430 = vadd.f32 %v409, %v426
  %v431 = vrot.slane %v373, 1
  %v432 = vrot.slane %v376, 1
  %v433 = vrot.slane %v379, 1
  %v434 = vrot.slane %v382, 1
  %v435 = vsel %vm253, %v433, %v434
  %v436 = vsel %vm253, %v432, %v433
  %v437 = vsel %vm253, %v431, %v432
  %v438 = vsel %vm253, %v434, %v431
  %v439 = vsel %vm266, %v437, 0.0
  %v440 = vsel %vm267, %v436, 0.0
  %v441 = vsel %vm268, %v435, 0.0
  %v442 = vsel %vm269, %v438, 0.0
  %v443 = vperm.slane %v342, 3
  %v444 = vmul.f32 %v443, %v439
  %v445 = vmul.f32 %v443, %v440
  %v446 = vmul.f32 %v443, %v441
  %v447 = vmul.f32 %v443, %v442
  %v448 = vadd.f32 %v427, %v444
  %v449 = vadd.f32 %v428, %v445
  %v450 = vadd.f32 %v429, %v446
  %v451 = vadd.f32 %v430, %v447
  %v452 = vperm.slane %v341, 0
  %v454 = vsel %vm21, %v448, 0
  %v457 = vsel %vm21, %v449, 0
  %v460 = vsel %vm21, %v450, 0
  %v463 = vsel %vm21, %v451, 0
  %465 = vmatpush.msra.mxu0 0.0
  %466 = vmatpush.msra.mxu0 0.0
  %467 = vmatpush.msra.mxu0 0.0
  %468 = vmatpush.msra.mxu0 0.0
  %469 = vmatpush.msra.mxu0 0.0
  %470 = vmatpush.msra.mxu0 0.0
  %471 = vmatpush.msra.mxu0 0.0
  %472 = vmatpush.msra.mxu0 0.0
  %473 = vmatpush.msra.mxu0 0.0
  %474 = vmatpush.msra.mxu0 0.0
  %475 = vmatpush.msra.mxu0 0.0
  %476 = vmatpush.msra.mxu0 0.0
  %477 = vmatpush.msra.mxu0 %v340
  %478 = vmatpush.msra.mxu0 %v339
  %479 = vmatpush.msra.mxu0 %v338
  %480 = vmatpush.msra.mxu0 %v337
  %481 = vmatmul.f32.gmra.mxu0 %v454
  %v482 = vpop.f32.mrf.mxu0
  %v483 = vadd.f32 %v452, %v482
  %484 = vmatmul.f32.gmra.mxu0 %v457
  %v485 = vpop.f32.mrf.mxu0
  %v486 = vadd.f32 %v452, %v485
  %487 = vmatmul.f32.gmra.mxu0 %v460
  %v488 = vpop.f32.mrf.mxu0
  %v489 = vadd.f32 %v452, %v488
  %490 = vmatmul.f32.gmra.mxu0 %v463
  %v491 = vpop.f32.mrf.mxu0
  %v492 = vadd.f32 %v452, %v491
  %493 = vdwg.mxu0
  %v494 = vmax.f32 %v483, 0.0
  %v495 = vmax.f32 %v486, 0.0
  %v496 = vmax.f32 %v489, 0.0
  %v497 = vmax.f32 %v492, 0.0
  %v498 = vld [vmem:[%s1 + $0xf8] sm:$0xff]
  %v499 = vld [vmem:[%s1 + $0x100] sm:$0xff]
  %v500 = vld [vmem:[%s1 + $0x108] sm:$0xff]
  %v501 = vld [vmem:[%s1 + $0x110] sm:$0xff]
  %v502 = vld [vmem:[%s1 + $0x118] sm:$0xff]
  %v503 = vld [vmem:[%s1 + $0x120] sm:$0xff]
  %v504 = vld [vmem:[%s1 + $0x128] sm:$0xff]
  %v505 = vld [vmem:[%s1 + $0x130] sm:$0xff]
  %v506 = vld [vmem:[%s1 + $0x3] sm:$0x1]
  %v507 = vperm.slane %v506, 0
  %v509 = vsel %vm134, %v494, 0
  %v512 = vsel %vm134, %v495, 0
  %v515 = vsel %vm134, %v496, 0
  %v518 = vsel %vm134, %v497, 0
  %520 = vmatpush.msra.mxu0 0.0
  %521 = vmatpush.msra.mxu0 0.0
  %522 = vmatpush.msra.mxu0 0.0
  %523 = vmatpush.msra.mxu0 0.0
  %524 = vmatpush.msra.mxu0 0.0
  %525 = vmatpush.msra.mxu0 0.0
  %526 = vmatpush.msra.mxu0 0.0
  %527 = vmatpush.msra.mxu0 0.0
  %528 = vmatpush.msra.mxu0 %v505
  %529 = vmatpush.msra.mxu0 %v504
  %530 = vmatpush.msra.mxu0 %v503
  %531 = vmatpush.msra.mxu0 %v502
  %532 = vmatpush.msra.mxu0 %v501
  %533 = vmatpush.msra.mxu0 %v500
  %534 = vmatpush.msra.mxu0 %v499
  %535 = vmatpush.msra.mxu0 %v498
  %536 = vmatmul.f32.gmra.mxu0 %v509
  %v537 = vpop.f32.mrf.mxu0
  %v538 = vadd.f32 %v507, %v537
  %539 = vmatmul.f32.gmra.mxu0 %v512
  %v540 = vpop.f32.mrf.mxu0
  %v541 = vadd.f32 %v507, %v540
  %542 = vmatmul.f32.gmra.mxu0 %v515
  %v543 = vpop.f32.mrf.mxu0
  %v544 = vadd.f32 %v507, %v543
  %545 = vmatmul.f32.gmra.mxu0 %v518
  %v546 = vpop.f32.mrf.mxu0
  %v547 = vadd.f32 %v507, %v546
  %548 = vdwg.mxu0
  %v549 = vlaneseq
  %v550 = vand.u32 %v549, 127
  %vm551 = vcmp.lt.s32.totalorder %v550, 16
  %vm552 = vcmp.lt.s32.totalorder %v550, 28
  %v553 = vsel %vm551, %v538, -1e+30
  %v554 = vsel %vm551, %v541, -1e+30
  %v555 = vsel %vm551, %v544, -1e+30
  %v556 = vsel %vm551, %v547, -1e+30
  %557 = vmax.xlane.f32.xlu0 %v553
  %v558 = vpop.xlane.xlu0 %557
  %559 = vmax.xlane.f32.xlu0 %v554
  %v560 = vpop.xlane.xlu0 %559
  %561 = vmax.xlane.f32.xlu0 %v555
  %v562 = vpop.xlane.xlu0 %561
  %563 = vmax.xlane.f32.xlu0 %v556
  %v564 = vpop.xlane.xlu0 %563
  %vm565 = vmxor %vm551, 1
  %vm566 = vmand %vm552, %vm565
  %v567 = vsel %vm566, %v538, -1e+30
  %v568 = vsel %vm566, %v541, -1e+30
  %v569 = vsel %vm566, %v544, -1e+30
  %v570 = vsel %vm566, %v547, -1e+30
  %571 = vmax.xlane.f32.xlu0 %v567
  %v572 = vpop.xlane.xlu0 %571
  %573 = vmax.xlane.f32.xlu0 %v568
  %v574 = vpop.xlane.xlu0 %573
  %575 = vmax.xlane.f32.xlu0 %v569
  %v576 = vpop.xlane.xlu0 %575
  %577 = vmax.xlane.f32.xlu0 %v570
  %v578 = vpop.xlane.xlu0 %577
  %v579 = vsel %vm551, %v558, %v572
  %v580 = vsel %vm551, %v560, %v574
  %v581 = vsel %vm551, %v562, %v576
  %v582 = vsel %vm551, %v564, %v578
  %v583 = vsub.f32 %v538, %v579
  %v584 = vsub.f32 %v541, %v580
  %v585 = vsub.f32 %v544, %v581
  %v586 = vsub.f32 %v547, %v582
  %v587 = vsel %vm552, %v583, -1e+30
  %v588 = vsel %vm552, %v584, -1e+30
  %v589 = vsel %vm552, %v585, -1e+30
  %v590 = vsel %vm552, %v586, -1e+30
  %v591 = vmul.f32 %v587, 1.442695
  %v592 = vpow.pop %v591
  %v593 = vmul.f32 %v588, 1.442695
  %v594 = vpow.pop %v593
  %v595 = vmul.f32 %v589, 1.442695
  %v596 = vpow.pop %v595
  %v597 = vmul.f32 %v590, 1.442695
  %v598 = vpow.pop %v597
  %v599 = vsel %vm551, %v592, 0.0
  %v600 = vsel %vm551, %v594, 0.0
  %v601 = vsel %vm551, %v596, 0.0
  %v602 = vsel %vm551, %v598, 0.0
  %603 = vadd.xlane.f32.xlu0 %v599
  %v604 = vpop.xlane.xlu0 %603
  %605 = vadd.xlane.f32.xlu0 %v600
  %v606 = vpop.xlane.xlu0 %605
  %607 = vadd.xlane.f32.xlu0 %v601
  %v608 = vpop.xlane.xlu0 %607
  %609 = vadd.xlane.f32.xlu0 %v602
  %v610 = vpop.xlane.xlu0 %609
  %v611 = vsel %vm551, 0.0, %v592
  %v612 = vsel %vm551, 0.0, %v594
  %v613 = vsel %vm551, 0.0, %v596
  %v614 = vsel %vm551, 0.0, %v598
  %615 = vadd.xlane.f32.xlu0 %v611
  %v616 = vpop.xlane.xlu0 %615
  %617 = vadd.xlane.f32.xlu0 %v612
  %v618 = vpop.xlane.xlu0 %617
  %619 = vadd.xlane.f32.xlu0 %v613
  %v620 = vpop.xlane.xlu0 %619
  %621 = vadd.xlane.f32.xlu0 %v614
  %v622 = vpop.xlane.xlu0 %621
  %v623 = vlog2.pop %v604
  %v624 = vmul.f32 %v623, 0.6931472
  %v625 = vlog2.pop %v606
  %v626 = vmul.f32 %v625, 0.6931472
  %v627 = vlog2.pop %v608
  %v628 = vmul.f32 %v627, 0.6931472
  %v629 = vlog2.pop %v610
  %v630 = vmul.f32 %v629, 0.6931472
  %v631 = vlog2.pop %v616
  %v632 = vmul.f32 %v631, 0.6931472
  %v633 = vlog2.pop %v618
  %v634 = vmul.f32 %v633, 0.6931472
  %v635 = vlog2.pop %v620
  %v636 = vmul.f32 %v635, 0.6931472
  %v637 = vlog2.pop %v622
  %v638 = vmul.f32 %v637, 0.6931472
  %v639 = vsel %vm551, %v624, %v632
  %v640 = vsel %vm551, %v626, %v634
  %v641 = vsel %vm551, %v628, %v636
  %v642 = vsel %vm551, %v630, %v638
  %v643 = vsub.f32 %v583, %v639
  %v644 = vsub.f32 %v584, %v640
  %v645 = vsub.f32 %v585, %v641
  %v646 = vsub.f32 %v586, %v642
  %v647 = vsel %vm552, %v643, 0.0
  %v648 = vsel %vm552, %v644, 0.0
  %v649 = vsel %vm552, %v645, 0.0
  %v650 = vsel %vm552, %v646, 0.0
  %651 = vst [vmem:[%s2] sm:$0xff] %v647
  %652 = vst [vmem:[%s2 + $0x8] sm:$0xff] %v648
  %653 = vst [vmem:[%s2 + $0x10] sm:$0xff] %v649
  %654 = vst [vmem:[%s2 + $0x18] sm:$0xff] %v650
  // Predicated region
  $region10: #{fsmn_kws_mt_forward.1} parent=0 // pred_check
    _
  $region11: #{fsmn_kws_mt_forward.1} parent=0 // pred_check_branch
    %656 = sbr.rel (0) target = $region13
  $region12: #{fsmn_kws_mt_forward.1} parent=0 // pred_region
    _
  $region13: #{fsmn_kws_mt_forward.1} parent=0 // pred_fallthru
    _
  // Predicated region
  $region14: #{fsmn_kws_mt_forward.1} parent=0 // pred_check
    _
  $region15: #{fsmn_kws_mt_forward.1} parent=0 // pred_check_branch
    %658 = sbr.rel (0) target = $region17
  $region16: #{fsmn_kws_mt_forward.1} parent=0 // pred_region
    _
  $region17: #{fsmn_kws_mt_forward.1} parent=0 // pred_fallthru
    _

</llo_original>
